<compile_context>
chip_gen: v6e
topology: v6e:2x2x1
jax: 0.10.0
libtpu: 0.0.40
codegen_flags: <defaults>
</compile_context>

<pallas_src>
import functools
import math

import jax
import jax.numpy as jnp
from jax import lax
from jax.experimental import pallas as pl
from jax.experimental.pallas import tpu as pltpu


# ----------------------------- helpers --------------------------------------

def _round_up(x, m):
    return (x + m - 1) // m * m


def _pick_tiles(B, I, O):
    # Lane-dense output tiles; double-buffered x + 2 weight tiles + out + acc
    # stay well under the scoped-VMEM default on all generations.
    tm = min(_round_up(B, 8), 256)
    tn = min(_round_up(O, 128), 512)
    tk = min(_round_up(I, 128), 1024)
    return tm, tn, tk


def _maybe_pad2d(a, rows, cols):
    r, c = a.shape
    if r == rows and c == cols:
        return a
    return jnp.pad(a, ((0, rows - r), (0, cols - c)))


# ----------------------------- Pallas kernels -------------------------------

# Contract the last dim of both operands (x: [tm, tk], w: [tn, tk]) — the
# weights keep their native [O, I] layout, no wrapper transpose needed.
_DN = (((1,), (1,)), ((), ()))


def _noisy_train_kernel(x_ref, wmu_ref, wsig_ref, ein_ref, eout_ref, b_ref,
                        o_ref, acc_ref):
    """Grid (M/tm, N/tn, K/tk). K is the reduction axis (last, 'arbitrary')."""
    k = pl.program_id(2)

    @pl.when(k == 0)
    def _():
        acc_ref[...] = jnp.zeros_like(acc_ref)

    x = x_ref[...]                                    # (tm, tk)
    # mu path:    x @ W_mu^T
    acc_ref[...] += lax.dot_general(x, wmu_ref[...], _DN,
                                    preferred_element_type=jnp.float32)
    # sigma path: ((x * eps_in) @ W_sigma^T) * eps_out   (factorized noise)
    acc_ref[...] += lax.dot_general(x * ein_ref[...], wsig_ref[...], _DN,
                                    preferred_element_type=jnp.float32) * eout_ref[...]

    @pl.when(k == pl.num_programs(2) - 1)
    def _():
        o_ref[...] = (acc_ref[...] + b_ref[...]).astype(o_ref.dtype)


def _noisy_eval_kernel(x_ref, wmu_ref, b_ref, o_ref, acc_ref):
    k = pl.program_id(2)

    @pl.when(k == 0)
    def _():
        acc_ref[...] = jnp.zeros_like(acc_ref)

    acc_ref[...] += lax.dot_general(x_ref[...], wmu_ref[...], _DN,
                                    preferred_element_type=jnp.float32)

    @pl.when(k == pl.num_programs(2) - 1)
    def _():
        o_ref[...] = (acc_ref[...] + b_ref[...]).astype(o_ref.dtype)


# ------------------------------ wrapper --------------------------------------

@functools.partial(jax.jit, static_argnames=("training",))
def noisy_linear(x, params, *, training=True):
    """Forward pass matching NoisyLinear.forward.

    x: [B, in_features] float32
    params: weight_mu/weight_sigma [O, I], bias_mu/bias_sigma/bias_epsilon [O],
            eps_in [I], eps_out [O]  (weight_epsilon == outer(eps_out, eps_in)).
    """
    x = jnp.asarray(x, jnp.float32)
    B, I = x.shape
    O = params["bias_mu"].shape[0]

    tm, tn, tk = _pick_tiles(B, I, O)
    M, N, K = _round_up(B, tm), _round_up(O, tn), _round_up(I, tk)
    grid = (M // tm, N // tn, K // tk)

    # Zero-pad (only when needed) so every block is (8,128)-aligned and the
    # output stores are unmasked; the wrapper slices the padding back off.
    x_p = _maybe_pad2d(x, M, K)
    wmu = _maybe_pad2d(params["weight_mu"], N, K)     # native [O, I] layout

    x_spec = pl.BlockSpec((tm, tk), lambda i, j, k: (i, k))
    w_spec = pl.BlockSpec((tn, tk), lambda i, j, k: (j, k))
    rowN_spec = pl.BlockSpec((1, tn), lambda i, j, k: (0, j))   # bias / eps_out
    rowK_spec = pl.BlockSpec((1, tk), lambda i, j, k: (0, k))   # eps_in
    out_spec = pl.BlockSpec((tm, tn), lambda i, j, k: (i, j))

    compiler_params = pltpu.CompilerParams(
        dimension_semantics=("parallel", "parallel", "arbitrary"))
    out_shape = jax.ShapeDtypeStruct((M, N), jnp.float32)
    scratch = [pltpu.VMEM((tm, tn), jnp.float32)]

    if training:
        wsig = _maybe_pad2d(params["weight_sigma"], N, K)
        ein = _maybe_pad2d(params["eps_in"].reshape(1, I), 1, K)
        eout = _maybe_pad2d(params["eps_out"].reshape(1, O), 1, N)
        bias = params["bias_mu"] + params["bias_sigma"] * params["bias_epsilon"]
        bias = _maybe_pad2d(bias.reshape(1, O), 1, N)

        out = pl.pallas_call(
            _noisy_train_kernel,
            out_shape=out_shape,
            grid_spec=pltpu.PrefetchScalarGridSpec(
                num_scalar_prefetch=0,
                grid=grid,
                in_specs=[x_spec, w_spec, w_spec, rowK_spec, rowN_spec, rowN_spec],
                out_specs=out_spec,
                scratch_shapes=scratch),
            compiler_params=compiler_params,
        )(x_p, wmu, wsig, ein, eout, bias)
    else:
        bias = _maybe_pad2d(params["bias_mu"].reshape(1, O), 1, N)
        out = pl.pallas_call(
            _noisy_eval_kernel,
            out_shape=out_shape,
            grid_spec=pltpu.PrefetchScalarGridSpec(
                num_scalar_prefetch=0,
                grid=grid,
                in_specs=[x_spec, w_spec, rowN_spec],
                out_specs=out_spec,
                scratch_shapes=scratch),
            compiler_params=compiler_params,
        )(x_p, wmu, bias)

    return out[:B, :O]


# ----------------------- deterministic parameter init -----------------------

def _scale_noise(key, size):
    # torch: x = randn(size); return sign(x) * sqrt(|x|)
    x = jax.random.normal(key, (size,), dtype=jnp.float32)
    return jnp.sign(x) * jnp.sqrt(jnp.abs(x))


def init_noisy_linear(key, in_features, out_features, std_init=0.5):
    k_wmu, k_bmu, k_ein, k_eout, k_beps = jax.random.split(key, 5)
    mu_range = 1.0 / math.sqrt(in_features)

    weight_mu = jax.random.uniform(
        k_wmu, (out_features, in_features), jnp.float32, -mu_range, mu_range)
    weight_sigma = jnp.full((out_features, in_features),
                            std_init / math.sqrt(in_features), jnp.float32)
    bias_mu = jax.random.uniform(
        k_bmu, (out_features,), jnp.float32, -mu_range, mu_range)
    bias_sigma = jnp.full((out_features,),
                          std_init / math.sqrt(out_features), jnp.float32)

    # reset_noise(): factorized gaussian noise.  The kernel uses eps_in/eps_out
    # directly; weight_epsilon (= outer(eps_out, eps_in)) is kept only so the
    # plain-JAX reference matches the PyTorch module literally.
    eps_in = _scale_noise(k_ein, in_features)
    eps_out = _scale_noise(k_eout, out_features)
    weight_epsilon = jnp.outer(eps_out, eps_in)
    bias_epsilon = _scale_noise(k_beps, out_features)

    return dict(weight_mu=weight_mu, weight_sigma=weight_sigma,
                weight_epsilon=weight_epsilon, bias_mu=bias_mu,
                bias_sigma=bias_sigma, bias_epsilon=bias_epsilon,
                eps_in=eps_in, eps_out=eps_out)


def _reference(x, params, training):
    if training:
        w = params["weight_mu"] + params["weight_sigma"] * params["weight_epsilon"]
        b = params["bias_mu"] + params["bias_sigma"] * params["bias_epsilon"]
    else:
        w, b = params["weight_mu"], params["bias_mu"]
    return x @ w.T + b


# --------------------------------- main --------------------------------------

if __name__ == "__main__":
    key = jax.random.PRNGKey(0)

    # 1) Small shapes implied by the module usage (exercises padding to the
    #    minimal (8, 128) tile and the single-step path).
    k_param, k_x, k2_param, k2_x = jax.random.split(key, 4)
    batch, in_features, out_features = 8, 32, 16
    params = init_noisy_linear(k_param, in_features, out_features, std_init=0.5)
    x = jax.random.normal(k_x, (batch, in_features), dtype=jnp.float32)

    y_train = noisy_linear(x, params, training=True)
    y_eval = noisy_linear(x, params, training=False)
    jax.block_until_ready((y_train, y_eval))

    assert jnp.allclose(y_train, _reference(x, params, True), atol=2e-4, rtol=2e-4)
    assert jnp.allclose(y_eval, _reference(x, params, False), atol=2e-4, rtol=2e-4)

    # 2) A larger, tile-aligned shape that exercises the multi-step K reduction
    #    (grid k = 2), multiple N tiles and the accumulator init/finalize path.
    b2, i2, o2 = 16, 2048, 1024
    params2 = init_noisy_linear(k2_param, i2, o2, std_init=0.5)
    x2 = jax.random.normal(k2_x, (b2, i2), dtype=jnp.float32)

    y2_train = noisy_linear(x2, params2, training=True)
    y2_eval = noisy_linear(x2, params2, training=False)
    jax.block_until_ready((y2_train, y2_eval))

    assert jnp.allclose(y2_train, _reference(x2, params2, True), atol=1e-3, rtol=1e-3)
    assert jnp.allclose(y2_eval, _reference(x2, params2, False), atol=1e-3, rtol=1e-3)

    print("KERNEL_OK")
</pallas_src>

<mosaic_0001>
module attributes {stable_mosaic.version = 11 : i64} {
  func.func @_noisy_train_kernel(%arg0: i32, %arg1: i32, %arg2: i32, %arg3: memref<8x128xf32, #tpu.memory_space<vmem>>, %arg4: memref<128x128xf32, #tpu.memory_space<vmem>>, %arg5: memref<128x128xf32, #tpu.memory_space<vmem>>, %arg6: memref<1x128xf32, #tpu.memory_space<vmem>>, %arg7: memref<1x128xf32, #tpu.memory_space<vmem>>, %arg8: memref<1x128xf32, #tpu.memory_space<vmem>>, %arg9: memref<8x128xf32, #tpu.memory_space<vmem>>, %arg10: memref<8x128xf32, #tpu.memory_space<vmem>>) attributes {dimension_semantics = [#tpu.dimension_semantics<parallel>, #tpu.dimension_semantics<parallel>, #tpu.dimension_semantics<arbitrary>], iteration_bounds = array<i64: 1, 1, 1>, scalar_prefetch = 0 : i64, scratch_operands = 1 : i64, tpu.core_type = #tpu.core_type<tc>, window_params = [{transform_indices = @transform_0, window_bounds = array<i64: 8, 128>}, {transform_indices = @transform_1, window_bounds = array<i64: 128, 128>}, {transform_indices = @transform_2, window_bounds = array<i64: 128, 128>}, {transform_indices = @transform_3, window_bounds = array<i64: 1, 128>}, {transform_indices = @transform_4, window_bounds = array<i64: 1, 128>}, {transform_indices = @transform_5, window_bounds = array<i64: 1, 128>}, {transform_indices = @transform_6, window_bounds = array<i64: 8, 128>}]} {
    %c0_i32 = arith.constant 0 : i32
    %0 = arith.cmpi eq, %arg2, %c0_i32 : i32
    %1 = arith.extui %0 : i1 to i32
    %c0_i32_0 = arith.constant 0 : i32
    %2 = arith.cmpi ne, %1, %c0_i32_0 : i32
    scf.if %2 {
      %cst_21 = arith.constant 0.000000e+00 : f32
      %23 = vector.broadcast %cst_21 : f32 to vector<8x128xf32>
      %c0_22 = arith.constant 0 : index
      %c0_23 = arith.constant 0 : index
      %24 = vector.load %arg10[%c0_22, %c0_23] : memref<8x128xf32, #tpu.memory_space<vmem>>, vector<8x128xf32>
      tpu.vector_store %arg10[%c0_22, %c0_23], %23 {strides = array<i32>} : memref<8x128xf32, #tpu.memory_space<vmem>>, vector<8x128xf32>,
    } else {
    }
    %c0 = arith.constant 0 : index
    %c0_1 = arith.constant 0 : index
    %3 = vector.load %arg3[%c0, %c0_1] : memref<8x128xf32, #tpu.memory_space<vmem>>, vector<8x128xf32>
    %c0_2 = arith.constant 0 : index
    %c0_3 = arith.constant 0 : index
    %4 = vector.load %arg10[%c0_2, %c0_3] : memref<8x128xf32, #tpu.memory_space<vmem>>, vector<8x128xf32>
    %c0_4 = arith.constant 0 : index
    %c0_5 = arith.constant 0 : index
    %5 = vector.load %arg4[%c0_4, %c0_5] : memref<128x128xf32, #tpu.memory_space<vmem>>, vector<128x128xf32>
    %cst = arith.constant dense<0.000000e+00> : vector<8x128xf32>
    %6 = tpu.matmul %3, %5, %cst {dimension_numbers = #tpu.dot_dimension_numbers<[1], [1], [0], [0], [0, 0, 1, 0], [], []>} : vector<8x128xf32>, vector<128x128xf32>, vector<8x128xf32> -> vector<8x128xf32>
    %7 = arith.addf %4, %6 : vector<8x128xf32>
    %c0_6 = arith.constant 0 : index
    %c0_7 = arith.constant 0 : index
    %8 = vector.load %arg10[%c0_6, %c0_7] : memref<8x128xf32, #tpu.memory_space<vmem>>, vector<8x128xf32>
    tpu.vector_store %arg10[%c0_6, %c0_7], %7 {strides = array<i32>} : memref<8x128xf32, #tpu.memory_space<vmem>>, vector<8x128xf32>,
    %c0_8 = arith.constant 0 : index
    %c0_9 = arith.constant 0 : index
    %9 = vector.load %arg10[%c0_8, %c0_9] : memref<8x128xf32, #tpu.memory_space<vmem>>, vector<8x128xf32>
    %c0_10 = arith.constant 0 : index
    %c0_11 = arith.constant 0 : index
    %10 = vector.load %arg6[%c0_10, %c0_11] : memref<1x128xf32, #tpu.memory_space<vmem>>, vector<1x128xf32>
    %11 = vector.broadcast %10 : vector<1x128xf32> to vector<8x128xf32>
    %12 = arith.mulf %3, %11 : vector<8x128xf32>
    %c0_12 = arith.constant 0 : index
    %c0_13 = arith.constant 0 : index
    %13 = vector.load %arg5[%c0_12, %c0_13] : memref<128x128xf32, #tpu.memory_space<vmem>>, vector<128x128xf32>
    %cst_14 = arith.constant dense<0.000000e+00> : vector<8x128xf32>
    %14 = tpu.matmul %12, %13, %cst_14 {dimension_numbers = #tpu.dot_dimension_numbers<[1], [1], [0], [0], [0, 0, 1, 0], [], []>} : vector<8x128xf32>, vector<128x128xf32>, vector<8x128xf32> -> vector<8x128xf32>
    %c0_15 = arith.constant 0 : index
    %c0_16 = arith.constant 0 : index
    %15 = vector.load %arg7[%c0_15, %c0_16] : memref<1x128xf32, #tpu.memory_space<vmem>>, vector<1x128xf32>
    %16 = vector.broadcast %15 : vector<1x128xf32> to vector<8x128xf32>
    %17 = arith.mulf %14, %16 : vector<8x128xf32>
    %18 = arith.addf %9, %17 : vector<8x128xf32>
    %c0_17 = arith.constant 0 : index
    %c0_18 = arith.constant 0 : index
    %19 = vector.load %arg10[%c0_17, %c0_18] : memref<8x128xf32, #tpu.memory_space<vmem>>, vector<8x128xf32>
    tpu.vector_store %arg10[%c0_17, %c0_18], %18 {strides = array<i32>} : memref<8x128xf32, #tpu.memory_space<vmem>>, vector<8x128xf32>,
    %c0_i32_19 = arith.constant 0 : i32
    %20 = arith.cmpi eq, %arg2, %c0_i32_19 : i32
    %21 = arith.extui %20 : i1 to i32
    %c0_i32_20 = arith.constant 0 : i32
    %22 = arith.cmpi ne, %21, %c0_i32_20 : i32
    scf.if %22 {
      %c0_21 = arith.constant 0 : index
      %c0_22 = arith.constant 0 : index
      %23 = vector.load %arg10[%c0_21, %c0_22] : memref<8x128xf32, #tpu.memory_space<vmem>>, vector<8x128xf32>
      %c0_23 = arith.constant 0 : index
      %c0_24 = arith.constant 0 : index
      %24 = vector.load %arg8[%c0_23, %c0_24] : memref<1x128xf32, #tpu.memory_space<vmem>>, vector<1x128xf32>
      %25 = vector.broadcast %24 : vector<1x128xf32> to vector<8x128xf32>
      %26 = arith.addf %23, %25 : vector<8x128xf32>
      %c0_25 = arith.constant 0 : index
      %c0_26 = arith.constant 0 : index
      %27 = vector.load %arg9[%c0_25, %c0_26] : memref<8x128xf32, #tpu.memory_space<vmem>>, vector<8x128xf32>
      tpu.vector_store %arg9[%c0_25, %c0_26], %26 {strides = array<i32>} : memref<8x128xf32, #tpu.memory_space<vmem>>, vector<8x128xf32>,
    } else {
    }
    return
  }
  func.func @transform_0(%arg0: i32, %arg1: i32, %arg2: i32) -> (i32, i32) {
    %c0_i32 = arith.constant 0 : i32
    return %arg0, %arg2 : i32, i32
  }
  func.func @transform_1(%arg0: i32, %arg1: i32, %arg2: i32) -> (i32, i32) {
    %c0_i32 = arith.constant 0 : i32
    return %arg1, %arg2 : i32, i32
  }
  func.func @transform_2(%arg0: i32, %arg1: i32, %arg2: i32) -> (i32, i32) {
    %c0_i32 = arith.constant 0 : i32
    return %arg1, %arg2 : i32, i32
  }
  func.func @transform_3(%arg0: i32, %arg1: i32, %arg2: i32) -> (i32, i32) {
    %c0_i32 = arith.constant 0 : i32
    %c0_i32_0 = arith.constant 0 : i32
    return %c0_i32, %arg2 : i32, i32
  }
  func.func @transform_4(%arg0: i32, %arg1: i32, %arg2: i32) -> (i32, i32) {
    %c0_i32 = arith.constant 0 : i32
    %c0_i32_0 = arith.constant 0 : i32
    return %c0_i32, %arg1 : i32, i32
  }
  func.func @transform_5(%arg0: i32, %arg1: i32, %arg2: i32) -> (i32, i32) {
    %c0_i32 = arith.constant 0 : i32
    %c0_i32_0 = arith.constant 0 : i32
    return %c0_i32, %arg1 : i32, i32
  }
  func.func @transform_6(%arg0: i32, %arg1: i32, %arg2: i32) -> (i32, i32) {
    %c0_i32 = arith.constant 0 : i32
    return %arg0, %arg1 : i32, i32
  }
}

</mosaic_0001>

<llo_original>
// kernel: noisy_linear.1
$region0: #{noisy_linear.1}
  #allocation0 [shape = 'u32[]', space=smem, size = 0x4, offset = 0x4, fixed_abs, tag = 'smem constant byte address 0x4 - core index']
  #allocation1 [shape = 'u32[144,128]{1,0:T(1,128)}', space=vmem, size = 0x12000, scoped, tag = 'internal scratch']
  #allocation2 [shape = 'f32[8,128]{1,0:T(8,128)}', space=vmem, size = 0x1000, scoped, tag = 'scratch operand']
  %s0 = inlined_call_operand.vmem [shape: f32[8,128], index: 0, kind: input, shape index: {}]
  %s1 = inlined_call_operand.vmem [shape: f32[128,128], index: 1, kind: input, shape index: {}]
  %s2 = inlined_call_operand.vmem [shape: f32[128,128], index: 2, kind: input, shape index: {}]
  %s3 = inlined_call_operand.vmem [shape: f32[1,128], index: 3, kind: input, shape index: {}]
  %s4 = inlined_call_operand.vmem [shape: f32[1,128], index: 4, kind: input, shape index: {}]
  %s5 = inlined_call_operand.vmem [shape: f32[1,128], index: 5, kind: input, shape index: {}]
  %s6 = inlined_call_operand.hbm [shape: f32[8,128], index: 6, kind: output, shape index: {}]
  %s7 = sld [smem:[#allocation0]]
  $region42: #{noisy_linear.1} parent=0
    _
  %s9 = ssub.s32 1, %s7
  %s10 = scalar_select 0, %s9, %s7
  $region1: #{noisy_linear.1} parent=0
    #allocation3 [shape = 'u8[4096]{0}', space=vmem, size = 0x1000, scoped, tag = 'output window, operand 0, single buffered']
    #allocation4 [shape = 's32[1]{0}', space=sflag, size = 0x4, scoped, tag = 'scoped memory for noisy_linear.1']
    %11 = vsyncpa [#allocation4], 0
    // Predicated region
    $region2: #{noisy_linear.1} parent=1 // pred_check
      _
    $region3: #{noisy_linear.1} parent=1 // pred_check_branch
      %13 = sbr.rel (0) target = $region5
    $region4: #{noisy_linear.1} parent=1 // pred_region
      _
    $region5: #{noisy_linear.1} parent=1 // pred_fallthru
      _
    // Predicated region
    $region6: #{noisy_linear.1} parent=1 // pred_check
      _
    $region7: #{noisy_linear.1} parent=1 // pred_check_branch
      %15 = sbr.rel (0) target = $region9
    $region8: #{noisy_linear.1} parent=1 // pred_region
      _
    $region9: #{noisy_linear.1} parent=1 // pred_fallthru
      _
    // Predicated region
    $region10: #{noisy_linear.1} parent=1 // pred_check
      _
    $region11: #{noisy_linear.1} parent=1 // pred_check_branch
      %17 = sbr.rel (0) target = $region13
    $region12: #{noisy_linear.1} parent=1 // pred_region
      _
    $region13: #{noisy_linear.1} parent=1 // pred_fallthru
      _
    // Predicated region
    $region14: #{noisy_linear.1} parent=1 // pred_check
      _
    $region15: #{noisy_linear.1} parent=1 // pred_check_branch
      %19 = sbr.rel (0) target = $region17
    $region16: #{noisy_linear.1} parent=1 // pred_region
      _
    $region17: #{noisy_linear.1} parent=1 // pred_fallthru
      _
    // Predicated region
    $region18: #{noisy_linear.1} parent=1 // pred_check
      _
    $region19: #{noisy_linear.1} parent=1 // pred_check_branch
      %21 = sbr.rel (0) target = $region21
    $region20: #{noisy_linear.1} parent=1 // pred_region
      _
    $region21: #{noisy_linear.1} parent=1 // pred_fallthru
      _
    // Predicated region
    $region22: #{noisy_linear.1} parent=1 // pred_check
      _
    $region23: #{noisy_linear.1} parent=1 // pred_check_branch
      %23 = sbr.rel (0) target = $region25
    $region24: #{noisy_linear.1} parent=1 // pred_region
      _
    $region25: #{noisy_linear.1} parent=1 // pred_fallthru
      _
    %p24 = scmp.eq.s32.totalorder 0, 0
    // Predicated region
    $region26: #{noisy_linear.1} parent=1 // pred_check
      %p25 = pneg %p24
    $region27: #{noisy_linear.1} parent=1 // pred_check_branch
      %27 = sbr.rel (%p25) target = $region29
    $region28: #{noisy_linear.1} parent=1 // pred_region
      %28 = vst [vmem:[#allocation2] sm:$0xff] 0.0
    $region29: #{noisy_linear.1} parent=1 // pred_fallthru
      _
    %v29 = vld [vmem:[%s0] sm:$0xff]
    %v30 = vld [vmem:[#allocation2] sm:$0xff]
    %v31 = vld [vmem:[%s1] sm:$0xff]
    %v32 = vld [vmem:[%s1 + $0x8] sm:$0xff]
    %v33 = vld [vmem:[%s1 + $0x10] sm:$0xff]
    %v34 = vld [vmem:[%s1 + $0x18] sm:$0xff]
    %v35 = vld [vmem:[%s1 + $0x20] sm:$0xff]
    %v36 = vld [vmem:[%s1 + $0x28] sm:$0xff]
    %v37 = vld [vmem:[%s1 + $0x30] sm:$0xff]
    %v38 = vld [vmem:[%s1 + $0x38] sm:$0xff]
    %v39 = vld [vmem:[%s1 + $0x40] sm:$0xff]
    %v40 = vld [vmem:[%s1 + $0x48] sm:$0xff]
    %v41 = vld [vmem:[%s1 + $0x50] sm:$0xff]
    %v42 = vld [vmem:[%s1 + $0x58] sm:$0xff]
    %v43 = vld [vmem:[%s1 + $0x60] sm:$0xff]
    %v44 = vld [vmem:[%s1 + $0x68] sm:$0xff]
    %v45 = vld [vmem:[%s1 + $0x70] sm:$0xff]
    %v46 = vld [vmem:[%s1 + $0x78] sm:$0xff]
    %47 = vmatprep.subr.mxu0 0.0
    %48 = vmatpush1.xpose.msra.mxu0 %v46
    %49 = vmatprep.subr.mxu0 0.0
    %50 = vmatpush1.xpose.msra.mxu0 %v45
    %51 = vmatprep.subr.mxu0 0.0
    %52 = vmatpush1.xpose.msra.mxu0 %v44
    %53 = vmatprep.subr.mxu0 0.0
    %54 = vmatpush1.xpose.msra.mxu0 %v43
    %55 = vmatprep.subr.mxu0 0.0
    %56 = vmatpush1.xpose.msra.mxu0 %v42
    %57 = vmatprep.subr.mxu0 0.0
    %58 = vmatpush1.xpose.msra.mxu0 %v41
    %59 = vmatprep.subr.mxu0 0.0
    %60 = vmatpush1.xpose.msra.mxu0 %v40
    %61 = vmatprep.subr.mxu0 0.0
    %62 = vmatpush1.xpose.msra.mxu0 %v39
    %63 = vmatprep.subr.mxu0 0.0
    %64 = vmatpush1.xpose.msra.mxu0 %v38
    %65 = vmatprep.subr.mxu0 0.0
    %66 = vmatpush1.xpose.msra.mxu0 %v37
    %67 = vmatprep.subr.mxu0 0.0
    %68 = vmatpush1.xpose.msra.mxu0 %v36
    %69 = vmatprep.subr.mxu0 0.0
    %70 = vmatpush1.xpose.msra.mxu0 %v35
    %71 = vmatprep.subr.mxu0 0.0
    %72 = vmatpush1.xpose.msra.mxu0 %v34
    %73 = vmatprep.subr.mxu0 0.0
    %74 = vmatpush1.xpose.msra.mxu0 %v33
    %75 = vmatprep.subr.mxu0 0.0
    %76 = vmatpush1.xpose.msra.mxu0 %v32
    %77 = vmatprep.subr.mxu0 0.0
    %78 = vmatpush1.xpose.msra.mxu0 %v31
    %79 = vmatprep.subr.mxu0 0.0
    %80 = vmatpush2.xpose.msra.mxu0 0.0
    %81 = vmatprep.subr.mxu0 0.0
    %82 = vmatpush2.xpose.msra.mxu0 0.0
    %83 = vmatprep.subr.mxu0 0.0
    %84 = vmatpush2.xpose.msra.mxu0 0.0
    %85 = vmatprep.subr.mxu0 0.0
    %86 = vmatpush2.xpose.msra.mxu0 0.0
    %87 = vmatprep.subr.mxu0 0.0
    %88 = vmatpush2.xpose.msra.mxu0 0.0
    %89 = vmatprep.subr.mxu0 0.0
    %90 = vmatpush2.xpose.msra.mxu0 0.0
    %91 = vmatprep.subr.mxu0 0.0
    %92 = vmatpush2.xpose.msra.mxu0 0.0
    %93 = vmatprep.subr.mxu0 0.0
    %94 = vmatpush2.xpose.msra.mxu0 0.0
    %95 = vmatprep.subr.mxu0 0.0
    %96 = vmatpush2.xpose.msra.mxu0 0.0
    %97 = vmatprep.subr.mxu0 0.0
    %98 = vmatpush2.xpose.msra.mxu0 0.0
    %99 = vmatprep.subr.mxu0 0.0
    %100 = vmatpush2.xpose.msra.mxu0 0.0
    %101 = vmatprep.subr.mxu0 0.0
    %102 = vmatpush2.xpose.msra.mxu0 0.0
    %103 = vmatprep.subr.mxu0 0.0
    %104 = vmatpush2.xpose.msra.mxu0 0.0
    %105 = vmatprep.subr.mxu0 0.0
    %106 = vmatpush2.xpose.msra.mxu0 0.0
    %107 = vmatprep.subr.mxu0 0.0
    %108 = vmatpush2.xpose.msra.mxu0 0.0
    %109 = vmatprep.subr.mxu0 0.0
    %110 = vmatpush2.xpose.msra.mxu0 0.0
    %111 = vmatprep.mubr.f32.mxu0 0.0
    %112 = vmatmul.mubr.f32.gmra.mxu0 %v29
    %v113 = vpop.f32.mrf.mxu0
    %v114 = vadd.f32 0.0, %v113
    %v115 = vpop.f32.mrf.mxu0
    %116 = vdwg.mxu0
    %v117 = vadd.f32 %v30, %v114
    %118 = vst [vmem:[#allocation2] sm:$0xff] %v117
    %v119 = vld [vmem:[#allocation2] sm:$0xff]
    %v120 = vld [vmem:[%s3] sm:$0x1]
    %v122 = vlaneseq
    %v123 = vshrl.u32 %v122, 7
    %v124 = vsub.s32 0, %v123
    %v125 = vrot.slane %v120, %v124
    %v127 = vmul.f32 %v29, %v125
    %v128 = vld [vmem:[%s2] sm:$0xff]
    %v129 = vld [vmem:[%s2 + $0x8] sm:$0xff]
    %v130 = vld [vmem:[%s2 + $0x10] sm:$0xff]
    %v131 = vld [vmem:[%s2 + $0x18] sm:$0xff]
    %v132 = vld [vmem:[%s2 + $0x20] sm:$0xff]
    %v133 = vld [vmem:[%s2 + $0x28] sm:$0xff]
    %v134 = vld [vmem:[%s2 + $0x30] sm:$0xff]
    %v135 = vld [vmem:[%s2 + $0x38] sm:$0xff]
    %v136 = vld [vmem:[%s2 + $0x40] sm:$0xff]
    %v137 = vld [vmem:[%s2 + $0x48] sm:$0xff]
    %v138 = vld [vmem:[%s2 + $0x50] sm:$0xff]
    %v139 = vld [vmem:[%s2 + $0x58] sm:$0xff]
    %v140 = vld [vmem:[%s2 + $0x60] sm:$0xff]
    %v141 = vld [vmem:[%s2 + $0x68] sm:$0xff]
    %v142 = vld [vmem:[%s2 + $0x70] sm:$0xff]
    %v143 = vld [vmem:[%s2 + $0x78] sm:$0xff]
    %144 = vmatprep.subr.mxu0 0.0
    %145 = vmatpush1.xpose.msra.mxu0 %v143
    %146 = vmatprep.subr.mxu0 0.0
    %147 = vmatpush1.xpose.msra.mxu0 %v142
    %148 = vmatprep.subr.mxu0 0.0
    %149 = vmatpush1.xpose.msra.mxu0 %v141
    %150 = vmatprep.subr.mxu0 0.0
    %151 = vmatpush1.xpose.msra.mxu0 %v140
    %152 = vmatprep.subr.mxu0 0.0
    %153 = vmatpush1.xpose.msra.mxu0 %v139
    %154 = vmatprep.subr.mxu0 0.0
    %155 = vmatpush1.xpose.msra.mxu0 %v138
    %156 = vmatprep.subr.mxu0 0.0
    %157 = vmatpush1.xpose.msra.mxu0 %v137
    %158 = vmatprep.subr.mxu0 0.0
    %159 = vmatpush1.xpose.msra.mxu0 %v136
    %160 = vmatprep.subr.mxu0 0.0
    %161 = vmatpush1.xpose.msra.mxu0 %v135
    %162 = vmatprep.subr.mxu0 0.0
    %163 = vmatpush1.xpose.msra.mxu0 %v134
    %164 = vmatprep.subr.mxu0 0.0
    %165 = vmatpush1.xpose.msra.mxu0 %v133
    %166 = vmatprep.subr.mxu0 0.0
    %167 = vmatpush1.xpose.msra.mxu0 %v132
    %168 = vmatprep.subr.mxu0 0.0
    %169 = vmatpush1.xpose.msra.mxu0 %v131
    %170 = vmatprep.subr.mxu0 0.0
    %171 = vmatpush1.xpose.msra.mxu0 %v130
    %172 = vmatprep.subr.mxu0 0.0
    %173 = vmatpush1.xpose.msra.mxu0 %v129
    %174 = vmatprep.subr.mxu0 0.0
    %175 = vmatpush1.xpose.msra.mxu0 %v128
    %176 = vmatprep.subr.mxu0 0.0
    %177 = vmatpush2.xpose.msra.mxu0 0.0
    %178 = vmatprep.subr.mxu0 0.0
    %179 = vmatpush2.xpose.msra.mxu0 0.0
    %180 = vmatprep.subr.mxu0 0.0
    %181 = vmatpush2.xpose.msra.mxu0 0.0
    %182 = vmatprep.subr.mxu0 0.0
    %183 = vmatpush2.xpose.msra.mxu0 0.0
    %184 = vmatprep.subr.mxu0 0.0
    %185 = vmatpush2.xpose.msra.mxu0 0.0
    %186 = vmatprep.subr.mxu0 0.0
    %187 = vmatpush2.xpose.msra.mxu0 0.0
    %188 = vmatprep.subr.mxu0 0.0
    %189 = vmatpush2.xpose.msra.mxu0 0.0
    %190 = vmatprep.subr.mxu0 0.0
    %191 = vmatpush2.xpose.msra.mxu0 0.0
    %192 = vmatprep.subr.mxu0 0.0
    %193 = vmatpush2.xpose.msra.mxu0 0.0
    %194 = vmatprep.subr.mxu0 0.0
    %195 = vmatpush2.xpose.msra.mxu0 0.0
    %196 = vmatprep.subr.mxu0 0.0
    %197 = vmatpush2.xpose.msra.mxu0 0.0
    %198 = vmatprep.subr.mxu0 0.0
    %199 = vmatpush2.xpose.msra.mxu0 0.0
    %200 = vmatprep.subr.mxu0 0.0
    %201 = vmatpush2.xpose.msra.mxu0 0.0
    %202 = vmatprep.subr.mxu0 0.0
    %203 = vmatpush2.xpose.msra.mxu0 0.0
    %204 = vmatprep.subr.mxu0 0.0
    %205 = vmatpush2.xpose.msra.mxu0 0.0
    %206 = vmatprep.subr.mxu0 0.0
    %207 = vmatpush2.xpose.msra.mxu0 0.0
    %208 = vmatprep.mubr.f32.mxu0 0.0
    %209 = vmatmul.mubr.f32.gmra.mxu0 %v127
    %v210 = vpop.f32.mrf.mxu0
    %v211 = vadd.f32 0.0, %v210
    %v212 = vpop.f32.mrf.mxu0
    %213 = vdwg.mxu0
    %v214 = vld [vmem:[%s4] sm:$0x1]
    %v216 = vlaneseq
    %v217 = vshrl.u32 %v216, 7
    %v218 = vsub.s32 0, %v217
    %v219 = vrot.slane %v214, %v218
    %v221 = vmul.f32 %v211, %v219
    %v222 = vadd.f32 %v119, %v221
    %223 = vst [vmem:[#allocation2] sm:$0xff] %v222
    // Predicated region
    $region30: #{noisy_linear.1} parent=1 // pred_check
      %p224 = pneg %p24
    $region31: #{noisy_linear.1} parent=1 // pred_check_branch
      %226 = sbr.rel (%p224) target = $region33
    $region32: #{noisy_linear.1} parent=1 // pred_region
      %v227 = vld [vmem:[#allocation2] sm:$0xff]
      %v228 = vld [vmem:[%s5] sm:$0x1]
      %v230 = vlaneseq
      %v231 = vshrl.u32 %v230, 7
      %v232 = vsub.s32 0, %v231
      %v233 = vrot.slane %v228, %v232
      %v235 = vadd.f32 %v227, %v233
      %236 = vst [vmem:[#allocation3] sm:$0xff] %v235
    $region33: #{noisy_linear.1} parent=1 // pred_fallthru
      _
    // Predicated region
    $region34: #{noisy_linear.1} parent=1 // pred_check
      _
    $region35: #{noisy_linear.1} parent=1 // pred_check_branch
      %238 = sbr.rel (0) target = $region37
    $region36: #{noisy_linear.1} parent=1 // pred_region
      %s240 = ssub.s32 128, 128
      %241 = vsyncadd [#allocation4], %s240
      %s243 = sshll.u32 [#allocation3], 4
      %s244 = int_to_ptr.vmem [resolvable:$true] %s243
      %246 = dma.vmem_to_hbm [thread:$0]  %s244, 128, %s6, [#allocation4]
    $region37: #{noisy_linear.1} parent=1 // pred_fallthru
      _
    // Predicated region
    $region38: #{noisy_linear.1} parent=1 // pred_check
      _
    $region39: #{noisy_linear.1} parent=1 // pred_check_branch
      %248 = sbr.rel (0) target = $region41
    $region40: #{noisy_linear.1} parent=1 // pred_region
      %249 = dma.done [#allocation4], 128
    $region41: #{noisy_linear.1} parent=1 // pred_fallthru
      _
    %250 = vsyncpa [#allocation4], 1

</llo_original>
